<compile_context>
chip_gen: v5e
topology: v5e:2x2
jax: 0.10.0
libtpu: 0.0.40
codegen_flags: <defaults>
</compile_context>

<pallas_src>
import functools

import jax
import jax.numpy as jnp
from jax.experimental import pallas as pl
from jax.experimental.pallas import tpu as pltpu


_LN_EPS = 1e-5
_SUBLANE = 8
_LANE = 128


def _round_up(x, m):
    return ((x + m - 1) // m) * m


# ----------------------------------------------------------------------------
# Kernel: (LayerNorm?) -> Linear -> (ReLU?) for a consecutive chunk of layers,
# activation carried in VMEM/vregs between layers (no HBM roundtrips).
# ----------------------------------------------------------------------------
def _stack_kernel(x_ref, *refs, ln_flags, relu_flags, ln_true_dim, matmul_dtype):
    """refs = (wt_0, b_0, ..., wt_{L-1}, b_{L-1}, o_ref)
       wt_i : (Kpad_i, Npad_i)  pre-transposed, zero-padded weight (VMEM-resident)
       b_i  : (1, Npad_i)       zero-padded bias
       o_ref: (TM, Npad_last)
    Padded feature columns of every layer output are exactly zero (padded weight
    columns + bias are zero), so LayerNorm statistics use the TRUE feature count
    plus a hoisted lane mask."""
    o_ref = refs[-1]
    h = x_ref[...].astype(jnp.float32)

    lane_mask = None  # hoisted: identical for every LN layer (shared hidden width)
    for i, (do_ln, do_relu) in enumerate(zip(ln_flags, relu_flags)):
        wt_ref = refs[2 * i]
        b_ref = refs[2 * i + 1]

        # TODO(synk): training-mode dropout (p=0.15) not implemented; eval-mode identity.
        if do_ln:
            # nn.LayerNorm([hidden_dim], elementwise_affine=False), eps=1e-5.
            kpad = h.shape[-1]
            inv_k = 1.0 / float(ln_true_dim)
            mean = jnp.sum(h, axis=-1, keepdims=True) * inv_k   # padded lanes are 0
            c = h - mean
            if kpad != ln_true_dim:
                if lane_mask is None or lane_mask.shape != h.shape:
                    lane = jax.lax.broadcasted_iota(jnp.int32, h.shape, dimension=1)
                    lane_mask = (lane < ln_true_dim).astype(jnp.float32)
                c = c * lane_mask                                # zero padded lanes
            var = jnp.sum(c * c, axis=-1, keepdims=True) * inv_k
            h = c * jax.lax.rsqrt(var + _LN_EPS)                 # padded lanes stay 0

        # MXU matmul: bf16 operands, f32 accumulation.
        y = jnp.dot(h.astype(matmul_dtype), wt_ref[...].astype(matmul_dtype),
                    preferred_element_type=jnp.float32)
        y = y + b_ref[...].astype(jnp.float32)

        if do_relu:
            y = jnp.maximum(y, 0.0)      # ReLU in f32 (v5e has no bf16 VPU)
        h = y

    o_ref[...] = h.astype(o_ref.dtype)


# ----------------------------------------------------------------------------
# Parameter construction / one-time layout prep
# ----------------------------------------------------------------------------
def init_params(key, in_dim, out_dim, n_layers, hidden_dim=None):
    """PyTorch-layout params: weight (out_f, in_f) ~ N(0, 0.01), bias = 0."""
    hidden_dim = hidden_dim if hidden_dim is not None else in_dim
    params = []
    for i in range(n_layers):
        if i == 0:
            shape = (hidden_dim, in_dim)
        elif i < n_layers - 1:
            shape = (hidden_dim, hidden_dim)
        else:
            shape = (out_dim, hidden_dim)
        key, sub = jax.random.split(key)
        w = 0.01 * jax.random.normal(sub, shape, dtype=jnp.float32)
        b = jnp.zeros((shape[0],), dtype=jnp.float32)
        params.append((w, b))
    return params


def prepare_params(params, *, matmul_dtype=jnp.bfloat16, feature_pad=_LANE):
    """One-time layout prep (NOT per forward call):
       - transpose each weight to (in_f, out_f) so the kernel computes x @ Wt,
       - zero-pad out_f (and downstream in_f) to multiples of `feature_pad`
         (128 default; 256 can help narrow layers on v6e/v7x) -> lane-dense
         unmasked stores + full MXU width; padded results stay exactly zero,
       - cast weights to the matmul dtype (bf16 halves weight DMA bytes)."""
    prepped = []
    for i, (w, b) in enumerate(params):
        n, k = w.shape
        npad = _round_up(n, feature_pad)
        kpad = k if i == 0 else _round_up(k, feature_pad)
        wt = jnp.zeros((kpad, npad), dtype=jnp.float32).at[:k, :n].set(w.T)
        bp = jnp.zeros((1, npad), dtype=jnp.float32).at[:, :n].set(b)
        prepped.append((wt.astype(matmul_dtype), bp))
    return prepped


# ----------------------------------------------------------------------------
# VMEM budgeting + single pallas_call for one chunk of consecutive layers
# ----------------------------------------------------------------------------
def _vmem_budget_bytes(frac=0.8):
    """Per-generation usable VMEM (~0.8x physical); conservative fallback."""
    try:
        cap = int(pltpu.get_tpu_info().vmem_capacity_bytes)
    except Exception:
        cap = 64 * 2 ** 20   # v7x-sized conservative default
    return int(frac * cap)


def _pair_bytes(p):
    wt, b = p
    return wt.size * wt.dtype.itemsize + b.size * b.dtype.itemsize


def _call_chunk(x_pad, chunk, ln_flags, relu_flags, *, ln_true_dim, matmul_dtype,
                tm, grid_steps, out_dtype, vmem_budget):
    m_pad, k_in = x_pad.shape
    n_out_pad = chunk[-1][0].shape[1]

    kernel = functools.partial(
        _stack_kernel,
        ln_flags=tuple(ln_flags), relu_flags=tuple(relu_flags),
        ln_true_dim=ln_true_dim, matmul_dtype=matmul_dtype)

    in_specs = [pl.BlockSpec((tm, k_in), lambda i: (i, 0))]
    flat_inputs = [x_pad]
    for wt, b in chunk:
        # Grid-invariant -> single-buffered: no wasted second VMEM copy.
        in_specs.append(pl.BlockSpec(wt.shape, lambda i: (0, 0),
                                     pipeline_mode=pl.Buffered(1)))
        in_specs.append(pl.BlockSpec(b.shape, lambda i: (0, 0),
                                     pipeline_mode=pl.Buffered(1)))
        flat_inputs.extend((wt, b))
    out_spec = pl.BlockSpec((tm, n_out_pad), lambda i: (i, 0))

    # Cost / VMEM hints.
    flops = sum(2 * m_pad * wt.shape[0] * wt.shape[1] for wt, _ in chunk)
    wb_bytes = sum(_pair_bytes(p) for p in chunk)
    out_itemsize = jnp.dtype(out_dtype).itemsize
    bytes_accessed = (x_pad.size * x_pad.dtype.itemsize + wb_bytes
                      + m_pad * n_out_pad * out_itemsize)
    n_ln = sum(bool(f) for f in ln_flags)
    cost = pl.CostEstimate(flops=int(flops),
                           transcendentals=int(n_ln * m_pad),
                           bytes_accessed=int(bytes_accessed))

    act_cols = max([k_in] + [wt.shape[1] for wt, _ in chunk])
    tile_bytes = (2 * tm * k_in * x_pad.dtype.itemsize       # double-buffered input tile
                  + 2 * tm * n_out_pad * out_itemsize        # double-buffered output tile
                  + wb_bytes                                  # single-buffered resident weights
                  + 4 * tm * act_cols * 4)                    # live activations / temporaries
    vmem_limit = int(min(max(int(1.5 * tile_bytes), 8 * 2 ** 20), vmem_budget))

    return pl.pallas_call(
        kernel,
        out_shape=jax.ShapeDtypeStruct((m_pad, n_out_pad), out_dtype),
        grid_spec=pl.GridSpec(grid=(grid_steps,), in_specs=in_specs,
                              out_specs=out_spec),
        compiler_params=pltpu.CompilerParams(
            dimension_semantics=("parallel",),
            vmem_limit_bytes=vmem_limit),
        cost_estimate=cost,
    )(*flat_inputs)


# ----------------------------------------------------------------------------
# Forward wrapper
# ----------------------------------------------------------------------------
def raw_data_projection_forward(x, prepped_params, out_dim, *,
                                do_layernorm=False,
                                suppress_final_activation=False,
                                hidden_dim=None,
                                matmul_dtype=jnp.bfloat16,
                                block_m=512,
                                return_padded=False):
    """Eval-mode forward of RawDataProjectionModule via fused Pallas kernel(s).

    x: (M, in_dim) f32 or bf16 (bf16 accepted as-is; no wrapper-side cast).
    prepped_params: output of prepare_params().
    hidden_dim: TRUE (unpadded) hidden width; required when do_layernorm.
    return_padded=True returns the (m_pad, n_last_pad) buffer and skips the
    trailing slice (one fewer HBM pass for the caller to absorb)."""
    n_layers = len(prepped_params)
    m, k0 = x.shape

    ln_flags = [bool(do_layernorm and i > 0) for i in range(n_layers)]
    relu_flags = [not (suppress_final_activation and i == n_layers - 1)
                  for i in range(n_layers)]

    if any(ln_flags):
        assert hidden_dim is not None, \
            "hidden_dim (true, unpadded) required for LayerNorm"
        # All LayerNorm'd layers must share the same (padded) hidden width.
        pad_h = prepped_params[0][0].shape[1]
        assert all(prepped_params[i][0].shape[0] == pad_h
                   for i in range(1, n_layers)), \
            "LayerNorm path assumes a single shared hidden width"

    # --- batch tiling: balanced tiles; >=2 grid steps when big enough so a
    # dual-TC chip (v7x) gets work on both cores (batch axis is "parallel").
    grid_steps = max(1, pl.cdiv(m, block_m))
    if grid_steps == 1 and m >= 2 * _LANE:
        grid_steps = 2
    tm = _round_up(max(1, pl.cdiv(m, grid_steps)), _SUBLANE)
    m_pad = grid_steps * tm
    x_pad = x if m_pad == m else jnp.pad(x, ((0, m_pad - m), (0, 0)))

    # --- residency plan: keep as many consecutive layers resident per launch
    # as fit the per-generation weight budget; otherwise split into chunks.
    vmem_budget = _vmem_budget_bytes()
    weight_budget = int(0.6 * vmem_budget)   # headroom for tiles/temps/scratch

    chunks, cur, cur_bytes = [], [], 0
    for p in prepped_params:
        pb = _pair_bytes(p)
        if cur and cur_bytes + pb > weight_budget:
            chunks.append(cur)
            cur, cur_bytes = [], 0
        cur.append(p)
        cur_bytes += pb
        # TODO(synk): a single layer whose weight alone exceeds the budget would
        # need a K/N-tiled streaming matmul (pltpu.emit_pipeline); not implemented.
    chunks.append(cur)

    h = x_pad
    li = 0
    for chunk in chunks:
        nl = len(chunk)
        h = _call_chunk(h, chunk, ln_flags[li:li + nl], relu_flags[li:li + nl],
                        ln_true_dim=hidden_dim, matmul_dtype=matmul_dtype,
                        tm=tm, grid_steps=grid_steps, out_dtype=jnp.float32,
                        vmem_budget=vmem_budget)
        li += nl

    if return_padded:
        return h                       # (m_pad, n_last_pad), padding is exact zeros
    return h[:m, :out_dim]


# ----------------------------------------------------------------------------
# Pure-JAX reference (kernel's dtype policy: bf16 matmul operands, f32 rest)
# ----------------------------------------------------------------------------
def _reference_forward(x, params, *, do_layernorm, suppress_final_activation,
                       matmul_dtype=jnp.bfloat16):
    n_layers = len(params)
    h = x.astype(jnp.float32)
    for i, (w, b) in enumerate(params):
        if do_layernorm and i > 0:
            mean = jnp.mean(h, axis=-1, keepdims=True)
            var = jnp.mean(jnp.square(h - mean), axis=-1, keepdims=True)
            h = (h - mean) * jax.lax.rsqrt(var + _LN_EPS)
        h = jnp.dot(h.astype(matmul_dtype), w.T.astype(matmul_dtype),
                    preferred_element_type=jnp.float32) + b
        if not (suppress_final_activation and i == n_layers - 1):
            h = jnp.maximum(h, 0.0)
    return h


if __name__ == "__main__":
    # Small, forward-consistent shapes: batch of flat feature vectors.
    batch, in_dim, hidden_dim, out_dim, n_layers = 8, 32, 64, 48, 3
    do_layernorm = True
    suppress_final_activation = True

    key = jax.random.PRNGKey(0)
    key, xkey = jax.random.split(key)
    x = jax.random.normal(xkey, (batch, in_dim), dtype=jnp.float32)

    params = init_params(key, in_dim, out_dim, n_layers, hidden_dim=hidden_dim)
    prepped = prepare_params(params, matmul_dtype=jnp.bfloat16)

    out = raw_data_projection_forward(
        x, prepped, out_dim,
        do_layernorm=do_layernorm,
        suppress_final_activation=suppress_final_activation,
        hidden_dim=hidden_dim,
        matmul_dtype=jnp.bfloat16)
    out = jax.block_until_ready(out)

    ref = _reference_forward(
        x, params,
        do_layernorm=do_layernorm,
        suppress_final_activation=suppress_final_activation,
        matmul_dtype=jnp.bfloat16)

    assert out.shape == (batch, out_dim), out.shape
    max_err = jnp.max(jnp.abs(out - ref))
    assert jnp.allclose(out, ref, atol=1e-4, rtol=1e-4), f"max abs err {max_err}"

    print("KERNEL_OK")
</pallas_src>

<mosaic_0001>
module attributes {stable_mosaic.version = 11 : i64} {
  func.func @_stack_kernel(%arg0: i32, %arg1: memref<8x32xf32, #tpu.memory_space<vmem>>, %arg2: memref<32x128xbf16, #tpu.memory_space<vmem>>, %arg3: memref<1x128xf32, #tpu.memory_space<vmem>>, %arg4: memref<128x128xbf16, #tpu.memory_space<vmem>>, %arg5: memref<1x128xf32, #tpu.memory_space<vmem>>, %arg6: memref<128x128xbf16, #tpu.memory_space<vmem>>, %arg7: memref<1x128xf32, #tpu.memory_space<vmem>>, %arg8: memref<8x128xf32, #tpu.memory_space<vmem>>) attributes {dimension_semantics = [#tpu.dimension_semantics<parallel>], iteration_bounds = array<i64: 1>, scalar_prefetch = 0 : i64, scratch_operands = 0 : i64, tpu.core_type = #tpu.core_type<tc>, window_params = [{transform_indices = @transform_0, window_bounds = array<i64: 8, 32>}, {pipeline_mode = #tpu.pipeline_mode<synchronous>, transform_indices = @transform_1, window_bounds = array<i64: 32, 128>}, {pipeline_mode = #tpu.pipeline_mode<synchronous>, transform_indices = @transform_2, window_bounds = array<i64: 1, 128>}, {pipeline_mode = #tpu.pipeline_mode<synchronous>, transform_indices = @transform_3, window_bounds = array<i64: 128, 128>}, {pipeline_mode = #tpu.pipeline_mode<synchronous>, transform_indices = @transform_4, window_bounds = array<i64: 1, 128>}, {pipeline_mode = #tpu.pipeline_mode<synchronous>, transform_indices = @transform_5, window_bounds = array<i64: 128, 128>}, {pipeline_mode = #tpu.pipeline_mode<synchronous>, transform_indices = @transform_6, window_bounds = array<i64: 1, 128>}, {transform_indices = @transform_7, window_bounds = array<i64: 8, 128>}]} {
    %c0 = arith.constant 0 : index
    %c0_0 = arith.constant 0 : index
    %0 = vector.load %arg1[%c0, %c0_0] : memref<8x32xf32, #tpu.memory_space<vmem>>, vector<8x32xf32>
    %1 = arith.truncf %0 : vector<8x32xf32> to vector<8x32xbf16>
    %c0_1 = arith.constant 0 : index
    %c0_2 = arith.constant 0 : index
    %2 = vector.load %arg2[%c0_1, %c0_2] : memref<32x128xbf16, #tpu.memory_space<vmem>>, vector<32x128xbf16>
    %cst = arith.constant dense<0.000000e+00> : vector<8x128xf32>
    %3 = tpu.matmul %1, %2, %cst {dimension_numbers = #tpu.dot_dimension_numbers<[1], [0], [0], [1], [0, 0, 1, 1], [], []>} : vector<8x32xbf16>, vector<32x128xbf16>, vector<8x128xf32> -> vector<8x128xf32>
    %c0_3 = arith.constant 0 : index
    %c0_4 = arith.constant 0 : index
    %4 = vector.load %arg3[%c0_3, %c0_4] : memref<1x128xf32, #tpu.memory_space<vmem>>, vector<1x128xf32>
    %5 = vector.broadcast %4 : vector<1x128xf32> to vector<8x128xf32>
    %6 = arith.addf %3, %5 : vector<8x128xf32>
    %cst_5 = arith.constant 0.000000e+00 : f32
    %7 = vector.broadcast %cst_5 : f32 to vector<8x128xf32>
    %8 = arith.maximumf %6, %7 : vector<8x128xf32>
    %cst_6 = arith.constant dense<0.000000e+00> : vector<8xf32>
    %9 = vector.multi_reduction <add>, %8, %cst_6 [1] : vector<8x128xf32> to vector<8xf32>
    %10 = vector.shape_cast %9 : vector<8xf32> to vector<8x1xf32>
    %cst_7 = arith.constant 1.562500e-02 : f32
    %11 = vector.broadcast %cst_7 : f32 to vector<8x1xf32>
    %12 = arith.mulf %10, %11 : vector<8x1xf32>
    %13 = vector.broadcast %12 : vector<8x1xf32> to vector<8x128xf32>
    %14 = arith.subf %8, %13 : vector<8x128xf32>
    %15 = tpu.iota {dimensions = array<i32: 1>} : vector<8x128xi32>
    %c64_i32 = arith.constant 64 : i32
    %16 = vector.broadcast %c64_i32 : i32 to vector<8x128xi32>
    %17 = arith.cmpi slt, %15, %16 : vector<8x128xi32>
    %18 = arith.extui %17 : vector<8x128xi1> to vector<8x128xi32>
    %19 = arith.sitofp %18 : vector<8x128xi32> to vector<8x128xf32>
    %20 = arith.mulf %14, %19 : vector<8x128xf32>
    %21 = arith.mulf %20, %20 : vector<8x128xf32>
    %cst_8 = arith.constant dense<0.000000e+00> : vector<8xf32>
    %22 = vector.multi_reduction <add>, %21, %cst_8 [1] : vector<8x128xf32> to vector<8xf32>
    %23 = vector.shape_cast %22 : vector<8xf32> to vector<8x1xf32>
    %cst_9 = arith.constant 1.562500e-02 : f32
    %24 = vector.broadcast %cst_9 : f32 to vector<8x1xf32>
    %25 = arith.mulf %23, %24 : vector<8x1xf32>
    %cst_10 = arith.constant 9.99999974E-6 : f32
    %26 = vector.broadcast %cst_10 : f32 to vector<8x1xf32>
    %27 = arith.addf %25, %26 : vector<8x1xf32>
    %28 = math.rsqrt %27 : vector<8x1xf32>
    %29 = vector.broadcast %28 : vector<8x1xf32> to vector<8x128xf32>
    %30 = arith.mulf %20, %29 : vector<8x128xf32>
    %31 = arith.truncf %30 : vector<8x128xf32> to vector<8x128xbf16>
    %c0_11 = arith.constant 0 : index
    %c0_12 = arith.constant 0 : index
    %32 = vector.load %arg4[%c0_11, %c0_12] : memref<128x128xbf16, #tpu.memory_space<vmem>>, vector<128x128xbf16>
    %cst_13 = arith.constant dense<0.000000e+00> : vector<8x128xf32>
    %33 = tpu.matmul %31, %32, %cst_13 {dimension_numbers = #tpu.dot_dimension_numbers<[1], [0], [0], [1], [0, 0, 1, 1], [], []>} : vector<8x128xbf16>, vector<128x128xbf16>, vector<8x128xf32> -> vector<8x128xf32>
    %c0_14 = arith.constant 0 : index
    %c0_15 = arith.constant 0 : index
    %34 = vector.load %arg5[%c0_14, %c0_15] : memref<1x128xf32, #tpu.memory_space<vmem>>, vector<1x128xf32>
    %35 = vector.broadcast %34 : vector<1x128xf32> to vector<8x128xf32>
    %36 = arith.addf %33, %35 : vector<8x128xf32>
    %cst_16 = arith.constant 0.000000e+00 : f32
    %37 = vector.broadcast %cst_16 : f32 to vector<8x128xf32>
    %38 = arith.maximumf %36, %37 : vector<8x128xf32>
    %cst_17 = arith.constant dense<0.000000e+00> : vector<8xf32>
    %39 = vector.multi_reduction <add>, %38, %cst_17 [1] : vector<8x128xf32> to vector<8xf32>
    %40 = vector.shape_cast %39 : vector<8xf32> to vector<8x1xf32>
    %cst_18 = arith.constant 1.562500e-02 : f32
    %41 = vector.broadcast %cst_18 : f32 to vector<8x1xf32>
    %42 = arith.mulf %40, %41 : vector<8x1xf32>
    %43 = vector.broadcast %42 : vector<8x1xf32> to vector<8x128xf32>
    %44 = arith.subf %38, %43 : vector<8x128xf32>
    %45 = arith.mulf %44, %19 : vector<8x128xf32>
    %46 = arith.mulf %45, %45 : vector<8x128xf32>
    %cst_19 = arith.constant dense<0.000000e+00> : vector<8xf32>
    %47 = vector.multi_reduction <add>, %46, %cst_19 [1] : vector<8x128xf32> to vector<8xf32>
    %48 = vector.shape_cast %47 : vector<8xf32> to vector<8x1xf32>
    %cst_20 = arith.constant 1.562500e-02 : f32
    %49 = vector.broadcast %cst_20 : f32 to vector<8x1xf32>
    %50 = arith.mulf %48, %49 : vector<8x1xf32>
    %cst_21 = arith.constant 9.99999974E-6 : f32
    %51 = vector.broadcast %cst_21 : f32 to vector<8x1xf32>
    %52 = arith.addf %50, %51 : vector<8x1xf32>
    %53 = math.rsqrt %52 : vector<8x1xf32>
    %54 = vector.broadcast %53 : vector<8x1xf32> to vector<8x128xf32>
    %55 = arith.mulf %45, %54 : vector<8x128xf32>
    %56 = arith.truncf %55 : vector<8x128xf32> to vector<8x128xbf16>
    %c0_22 = arith.constant 0 : index
    %c0_23 = arith.constant 0 : index
    %57 = vector.load %arg6[%c0_22, %c0_23] : memref<128x128xbf16, #tpu.memory_space<vmem>>, vector<128x128xbf16>
    %cst_24 = arith.constant dense<0.000000e+00> : vector<8x128xf32>
    %58 = tpu.matmul %56, %57, %cst_24 {dimension_numbers = #tpu.dot_dimension_numbers<[1], [0], [0], [1], [0, 0, 1, 1], [], []>} : vector<8x128xbf16>, vector<128x128xbf16>, vector<8x128xf32> -> vector<8x128xf32>
    %c0_25 = arith.constant 0 : index
    %c0_26 = arith.constant 0 : index
    %59 = vector.load %arg7[%c0_25, %c0_26] : memref<1x128xf32, #tpu.memory_space<vmem>>, vector<1x128xf32>
    %60 = vector.broadcast %59 : vector<1x128xf32> to vector<8x128xf32>
    %61 = arith.addf %58, %60 : vector<8x128xf32>
    %c0_27 = arith.constant 0 : index
    %c0_28 = arith.constant 0 : index
    %62 = vector.load %arg8[%c0_27, %c0_28] : memref<8x128xf32, #tpu.memory_space<vmem>>, vector<8x128xf32>
    tpu.vector_store %arg8[%c0_27, %c0_28], %61 {strides = array<i32>} : memref<8x128xf32, #tpu.memory_space<vmem>>, vector<8x128xf32>,
    return
  }
  func.func @transform_0(%arg0: i32) -> (i32, i32) {
    %c0_i32 = arith.constant 0 : i32
    %c0_i32_0 = arith.constant 0 : i32
    return %arg0, %c0_i32 : i32, i32
  }
  func.func @transform_1(%arg0: i32) -> (i32, i32) {
    %c0_i32 = arith.constant 0 : i32
    %c0_i32_0 = arith.constant 0 : i32
    %c0_i32_1 = arith.constant 0 : i32
    return %c0_i32, %c0_i32_0 : i32, i32
  }
  func.func @transform_2(%arg0: i32) -> (i32, i32) {
    %c0_i32 = arith.constant 0 : i32
    %c0_i32_0 = arith.constant 0 : i32
    %c0_i32_1 = arith.constant 0 : i32
    return %c0_i32, %c0_i32_0 : i32, i32
  }
  func.func @transform_3(%arg0: i32) -> (i32, i32) {
    %c0_i32 = arith.constant 0 : i32
    %c0_i32_0 = arith.constant 0 : i32
    %c0_i32_1 = arith.constant 0 : i32
    return %c0_i32, %c0_i32_0 : i32, i32
  }
  func.func @transform_4(%arg0: i32) -> (i32, i32) {
    %c0_i32 = arith.constant 0 : i32
    %c0_i32_0 = arith.constant 0 : i32
    %c0_i32_1 = arith.constant 0 : i32
    return %c0_i32, %c0_i32_0 : i32, i32
  }
  func.func @transform_5(%arg0: i32) -> (i32, i32) {
    %c0_i32 = arith.constant 0 : i32
    %c0_i32_0 = arith.constant 0 : i32
    %c0_i32_1 = arith.constant 0 : i32
    return %c0_i32, %c0_i32_0 : i32, i32
  }
  func.func @transform_6(%arg0: i32) -> (i32, i32) {
    %c0_i32 = arith.constant 0 : i32
    %c0_i32_0 = arith.constant 0 : i32
    %c0_i32_1 = arith.constant 0 : i32
    return %c0_i32, %c0_i32_0 : i32, i32
  }
  func.func @transform_7(%arg0: i32) -> (i32, i32) {
    %c0_i32 = arith.constant 0 : i32
    %c0_i32_0 = arith.constant 0 : i32
    return %arg0, %c0_i32 : i32, i32
  }
}

</mosaic_0001>

<llo_original>
// kernel: tpu_custom_call.1
$region0: #{tpu_custom_call.1}
  #allocation0 [shape = 'u32[]', space=smem, size = 0x4, offset = 0x4, fixed_abs, tag = 'smem constant byte address 0x4 - core index']
  #allocation1 [shape = 'u32[72,128]{1,0:T(1,128)}', space=vmem, size = 0x9000, scoped, tag = 'internal scratch']
  %s0 = inlined_call_operand.hbm [shape: f32[8,32], index: 0, kind: input, shape index: {}]
  %s1 = inlined_call_operand.hbm [shape: bf16[32,128], index: 1, kind: input, shape index: {}]
  %s2 = inlined_call_operand.vmem [shape: f32[1,128], index: 2, kind: input, shape index: {}]
  %s3 = inlined_call_operand.hbm [shape: bf16[128,128], index: 3, kind: input, shape index: {}]
  %s4 = inlined_call_operand.vmem [shape: f32[1,128], index: 4, kind: input, shape index: {}]
  %s5 = inlined_call_operand.hbm [shape: bf16[128,128], index: 5, kind: input, shape index: {}]
  %s6 = inlined_call_operand.vmem [shape: f32[1,128], index: 6, kind: input, shape index: {}]
  %s7 = inlined_call_operand.hbm [shape: f32[8,128], index: 7, kind: output, shape index: {}]
  %s8 = sld [smem:[#allocation0]]
  $region54: #{tpu_custom_call.1} parent=0
    _
  %s10 = ssub.s32 1, %s8
  %s11 = scalar_select 0, %s10, %s8
  $region1: #{tpu_custom_call.1} parent=0
    #allocation2 [shape = 'u8[4096]{0}', space=vmem, size = 0x1000, scoped, tag = 'input window, operand 0, single buffered']
    #allocation3 [shape = 's32[1]{0}', space=sflag, size = 0x4, scoped, tag = 'scoped memory for tpu_custom_call.1']
    #allocation4 [shape = 's32[1]{0}', space=sflag, size = 0x4, scoped, tag = 'scoped memory for tpu_custom_call.1']
    #allocation5 [shape = 'u8[8192]{0}', space=vmem, size = 0x2000, scoped, tag = 'input window, operand 1, single buffered']
    #allocation6 [shape = 's32[1]{0}', space=sflag, size = 0x4, scoped, tag = 'scoped memory for tpu_custom_call.1']
    #allocation7 [shape = 'u8[32768]{0}', space=vmem, size = 0x8000, scoped, tag = 'input window, operand 3, single buffered']
    #allocation8 [shape = 'u8[32768]{0}', space=vmem, size = 0x8000, scoped, tag = 'input window, operand 5, single buffered']
    #allocation9 [shape = 's32[1]{0}', space=sflag, size = 0x4, scoped, tag = 'scoped memory for tpu_custom_call.1']
    #allocation10 [shape = 'u8[4096]{0}', space=vmem, size = 0x1000, scoped, tag = 'output window, operand 0, single buffered']
    %12 = vsyncpa [#allocation3], 0
    %13 = vsyncpa [#allocation6], 0
    %14 = vsyncpa [#allocation9], 0
    %15 = vsyncpa [#allocation4], 0
    // Predicated region
    $region2: #{tpu_custom_call.1} parent=1 // pred_check
      _
    $region3: #{tpu_custom_call.1} parent=1 // pred_check_branch
      %17 = sbr.rel (0) target = $region5
    $region4: #{tpu_custom_call.1} parent=1 // pred_region
      %19 = vsyncadd [#allocation3], 0
      %s21 = sshll.u32 %s0, 4
      %s22 = int_to_ptr.hbm [resolvable:$true] %s21
      %s23 = sshll.u32 [#allocation2], 4
      %s24 = int_to_ptr.vmem [resolvable:$true] %s23
      %26 = dma.hbm_to_vmem [thread:$0]  %s22, 128, %s24, [#allocation3]
    $region5: #{tpu_custom_call.1} parent=1 // pred_fallthru
      _
    // Predicated region
    $region6: #{tpu_custom_call.1} parent=1 // pred_check
      _
    $region7: #{tpu_custom_call.1} parent=1 // pred_check_branch
      %28 = sbr.rel (0) target = $region9
    $region8: #{tpu_custom_call.1} parent=1 // pred_region
      %30 = vsyncadd [#allocation6], 0
      %s31 = sshll.u32 %s1, 4
      %s32 = int_to_ptr.hbm [resolvable:$true] %s31
      %s33 = sshll.u32 [#allocation5], 4
      %s34 = int_to_ptr.vmem [resolvable:$true] %s33
      %39 = dma.hbm_to_vmem [thread:$0]  %s32, 256, %s34, [#allocation6], 64, 64, 4
    $region9: #{tpu_custom_call.1} parent=1 // pred_fallthru
      _
    // Predicated region
    $region10: #{tpu_custom_call.1} parent=1 // pred_check
      _
    $region11: #{tpu_custom_call.1} parent=1 // pred_check_branch
      %41 = sbr.rel (0) target = $region13
    $region12: #{tpu_custom_call.1} parent=1 // pred_region
      _
    $region13: #{tpu_custom_call.1} parent=1 // pred_fallthru
      _
    // Predicated region
    $region14: #{tpu_custom_call.1} parent=1 // pred_check
      _
    $region15: #{tpu_custom_call.1} parent=1 // pred_check_branch
      %43 = sbr.rel (0) target = $region17
    $region16: #{tpu_custom_call.1} parent=1 // pred_region
      %45 = vsyncadd [#allocation6], 0
      %s46 = sshll.u32 %s3, 4
      %s47 = int_to_ptr.hbm [resolvable:$true] %s46
      %s48 = sshll.u32 [#allocation7], 4
      %s49 = int_to_ptr.vmem [resolvable:$true] %s48
      %54 = dma.hbm_to_vmem [thread:$0]  %s47, 1024, %s49, [#allocation6], 64, 64, 4
    $region17: #{tpu_custom_call.1} parent=1 // pred_fallthru
      _
    // Predicated region
    $region18: #{tpu_custom_call.1} parent=1 // pred_check
      _
    $region19: #{tpu_custom_call.1} parent=1 // pred_check_branch
      %56 = sbr.rel (0) target = $region21
    $region20: #{tpu_custom_call.1} parent=1 // pred_region
      _
    $region21: #{tpu_custom_call.1} parent=1 // pred_fallthru
      _
    // Predicated region
    $region22: #{tpu_custom_call.1} parent=1 // pred_check
      _
    $region23: #{tpu_custom_call.1} parent=1 // pred_check_branch
      %58 = sbr.rel (0) target = $region25
    $region24: #{tpu_custom_call.1} parent=1 // pred_region
      %60 = vsyncadd [#allocation9], 0
      %s61 = sshll.u32 %s5, 4
      %s62 = int_to_ptr.hbm [resolvable:$true] %s61
      %s63 = sshll.u32 [#allocation8], 4
      %s64 = int_to_ptr.vmem [resolvable:$true] %s63
      %69 = dma.hbm_to_vmem [thread:$0]  %s62, 1024, %s64, [#allocation9], 64, 64, 4
    $region25: #{tpu_custom_call.1} parent=1 // pred_fallthru
      _
    // Predicated region
    $region26: #{tpu_custom_call.1} parent=1 // pred_check
      _
    $region27: #{tpu_custom_call.1} parent=1 // pred_check_branch
      %71 = sbr.rel (0) target = $region29
    $region28: #{tpu_custom_call.1} parent=1 // pred_region
      _
    $region29: #{tpu_custom_call.1} parent=1 // pred_fallthru
      _
    // Predicated region
    $region30: #{tpu_custom_call.1} parent=1 // pred_check
      _
    $region31: #{tpu_custom_call.1} parent=1 // pred_check_branch
      %73 = sbr.rel (0) target = $region33
    $region32: #{tpu_custom_call.1} parent=1 // pred_region
      %75 = dma.done [#allocation3], 128
    $region33: #{tpu_custom_call.1} parent=1 // pred_fallthru
      _
    // Predicated region
    $region34: #{tpu_custom_call.1} parent=1 // pred_check
      _
    $region35: #{tpu_custom_call.1} parent=1 // pred_check_branch
      %77 = sbr.rel (0) target = $region37
    $region36: #{tpu_custom_call.1} parent=1 // pred_region
      %79 = dma.done [#allocation6], 256
    $region37: #{tpu_custom_call.1} parent=1 // pred_fallthru
      _
    // Predicated region
    $region38: #{tpu_custom_call.1} parent=1 // pred_check
      _
    $region39: #{tpu_custom_call.1} parent=1 // pred_check_branch
      %81 = sbr.rel (0) target = $region41
    $region40: #{tpu_custom_call.1} parent=1 // pred_region
      %83 = dma.done [#allocation6], 1024
    $region41: #{tpu_custom_call.1} parent=1 // pred_fallthru
      _
    // Predicated region
    $region42: #{tpu_custom_call.1} parent=1 // pred_check
      _
    $region43: #{tpu_custom_call.1} parent=1 // pred_check_branch
      %85 = sbr.rel (0) target = $region45
    $region44: #{tpu_custom_call.1} parent=1 // pred_region
      %87 = dma.done [#allocation9], 1024
    $region45: #{tpu_custom_call.1} parent=1 // pred_fallthru
      _
    %v89 = vld [vmem:[#allocation2] sm:$0xff]
    %v90 = vpack.c.bf16 %v89, %v89
    %v91 = vld [vmem:[#allocation5] sm:$0xf]
    %v92 = vld [vmem:[#allocation5 + $0x4] sm:$0xf]
    %v93 = vld [vmem:[#allocation5 + $0x8] sm:$0xf]
    %v94 = vld [vmem:[#allocation5 + $0xc] sm:$0xf]
    %v95 = vld [vmem:[%s2] sm:$0x1]
    %v97 = vperm.slane %v95, 0
    %v103 = vunpack.c.l.b16 %v91
    %v104 = vunpack.c.l.b16 %v92
    %v105 = vunpack.c.l.b16 %v93
    %v106 = vunpack.c.l.b16 %v94
    %v107 = vpack.c.b16 %v104, %v103
    %v108 = vpack.c.b16 %v106, %v105
    %vm111 = vcmask 261120
    %v113 = vsel %vm111, %v90, 0
    %115 = vmatpush.bf16.msra.mxu0 0
    %116 = vmatpush.bf16.msra.mxu0 0
    %117 = vmatpush.bf16.msra.mxu0 0
    %118 = vmatpush.bf16.msra.mxu0 0
    %119 = vmatpush.bf16.msra.mxu0 0
    %120 = vmatpush.bf16.msra.mxu0 0
    %121 = vmatpush.bf16.msra.mxu0 %v108
    %122 = vmatpush.bf16.msra.mxu0 %v107
    %123 = vmatmul.bf16.gmra.mxu0 %v113
    %v124 = vpop.f32.mrf.mxu0
    %v125 = vadd.f32 %v97, %v124
    %v126 = vpop.f32.mrf.mxu0
    %127 = vdwg.mxu0
    %v128 = vmax.f32 %v125, 0.0
    %129 = vadd.xlane.f32.xlu0 %v128
    %v130 = vpop.xlane.xlu0 %129
    %v131 = vmul.f32 %v130, 0.015625
    %v132 = vsub.f32 %v128, %v131
    %v133 = vlaneseq
    %v134 = vand.u32 %v133, 127
    %vm135 = vcmp.lt.s32.totalorder %v134, 64
    %v136 = vsel %vm135, 1, 0
    %v137 = vcvt.s32.f32 %v136
    %v138 = vmul.f32 %v132, %v137
    %v139 = vmul.f32 %v138, %v138
    %140 = vadd.xlane.f32.xlu0 %v139
    %v141 = vpop.xlane.xlu0 %140
    %v142 = vmul.f32 %v141, 0.015625
    %v143 = vadd.f32 %v142, 1e-05
    %v144 = vrsqrt.pop %v143
    %v145 = vmul.f32 %v144, %v143
    %v146 = vmul.f32 %v145, %v144
    %v147 = vmul.f32 0.5, %v146
    %v148 = vsub.f32 1.5, %v147
    %v149 = vmul.f32 %v144, %v148
    %vm150 = vweird.f32 %v143
    %vm151 = vweird.f32 %v144
    %vm152 = vmor %vm150, %vm151
    %v153 = vsel %vm152, %v144, %v149
    %v154 = vmul.f32 %v138, %v153
    %v155 = vpack.c.bf16 %v154, %v154
    %v156 = vld [vmem:[#allocation7] sm:$0xf]
    %v157 = vld [vmem:[#allocation7 + $0x4] sm:$0xf]
    %v158 = vld [vmem:[#allocation7 + $0x8] sm:$0xf]
    %v159 = vld [vmem:[#allocation7 + $0xc] sm:$0xf]
    %v160 = vld [vmem:[#allocation7 + $0x10] sm:$0xf]
    %v161 = vld [vmem:[#allocation7 + $0x14] sm:$0xf]
    %v162 = vld [vmem:[#allocation7 + $0x18] sm:$0xf]
    %v163 = vld [vmem:[#allocation7 + $0x1c] sm:$0xf]
    %v164 = vld [vmem:[#allocation7 + $0x20] sm:$0xf]
    %v165 = vld [vmem:[#allocation7 + $0x24] sm:$0xf]
    %v166 = vld [vmem:[#allocation7 + $0x28] sm:$0xf]
    %v167 = vld [vmem:[#allocation7 + $0x2c] sm:$0xf]
    %v168 = vld [vmem:[#allocation7 + $0x30] sm:$0xf]
    %v169 = vld [vmem:[#allocation7 + $0x34] sm:$0xf]
    %v170 = vld [vmem:[#allocation7 + $0x38] sm:$0xf]
    %v171 = vld [vmem:[#allocation7 + $0x3c] sm:$0xf]
    %v172 = vld [vmem:[%s4] sm:$0x1]
    %v174 = vperm.slane %v172, 0
    %v192 = vunpack.c.l.b16 %v156
    %v193 = vunpack.c.l.b16 %v157
    %v194 = vunpack.c.l.b16 %v158
    %v195 = vunpack.c.l.b16 %v159
    %v196 = vunpack.c.l.b16 %v160
    %v197 = vunpack.c.l.b16 %v161
    %v198 = vunpack.c.l.b16 %v162
    %v199 = vunpack.c.l.b16 %v163
    %v200 = vunpack.c.l.b16 %v164
    %v201 = vunpack.c.l.b16 %v165
    %v202 = vunpack.c.l.b16 %v166
    %v203 = vunpack.c.l.b16 %v167
    %v204 = vunpack.c.l.b16 %v168
    %v205 = vunpack.c.l.b16 %v169
    %v206 = vunpack.c.l.b16 %v170
    %v207 = vunpack.c.l.b16 %v171
    %v208 = vpack.c.b16 %v193, %v192
    %v209 = vpack.c.b16 %v195, %v194
    %v210 = vpack.c.b16 %v197, %v196
    %v211 = vpack.c.b16 %v199, %v198
    %v212 = vpack.c.b16 %v201, %v200
    %v213 = vpack.c.b16 %v203, %v202
    %v214 = vpack.c.b16 %v205, %v204
    %v215 = vpack.c.b16 %v207, %v206
    %224 = vmatpush.bf16.msra.mxu0 %v215
    %225 = vmatpush.bf16.msra.mxu0 %v214
    %226 = vmatpush.bf16.msra.mxu0 %v213
    %227 = vmatpush.bf16.msra.mxu0 %v212
    %228 = vmatpush.bf16.msra.mxu0 %v211
    %229 = vmatpush.bf16.msra.mxu0 %v210
    %230 = vmatpush.bf16.msra.mxu0 %v209
    %231 = vmatpush.bf16.msra.mxu0 %v208
    %232 = vmatmul.bf16.gmra.mxu0 %v155
    %v233 = vpop.f32.mrf.mxu0
    %v234 = vadd.f32 %v174, %v233
    %v235 = vpop.f32.mrf.mxu0
    %236 = vdwg.mxu0
    %v237 = vmax.f32 %v234, 0.0
    %238 = vadd.xlane.f32.xlu0 %v237
    %v239 = vpop.xlane.xlu0 %238
    %v240 = vmul.f32 %v239, 0.015625
    %v241 = vsub.f32 %v237, %v240
    %v242 = vmul.f32 %v241, %v137
    %v243 = vmul.f32 %v242, %v242
    %244 = vadd.xlane.f32.xlu0 %v243
    %v245 = vpop.xlane.xlu0 %244
    %v246 = vmul.f32 %v245, 0.015625
    %v247 = vadd.f32 %v246, 1e-05
    %v248 = vrsqrt.pop %v247
    %v249 = vmul.f32 %v248, %v247
    %v250 = vmul.f32 %v249, %v248
    %v251 = vmul.f32 0.5, %v250
    %v252 = vsub.f32 1.5, %v251
    %v253 = vmul.f32 %v248, %v252
    %vm254 = vweird.f32 %v247
    %vm255 = vweird.f32 %v248
    %vm256 = vmor %vm254, %vm255
    %v257 = vsel %vm256, %v248, %v253
    %v258 = vmul.f32 %v242, %v257
    %v259 = vpack.c.bf16 %v258, %v258
    %v260 = vld [vmem:[#allocation8] sm:$0xf]
    %v261 = vld [vmem:[#allocation8 + $0x4] sm:$0xf]
    %v262 = vld [vmem:[#allocation8 + $0x8] sm:$0xf]
    %v263 = vld [vmem:[#allocation8 + $0xc] sm:$0xf]
    %v264 = vld [vmem:[#allocation8 + $0x10] sm:$0xf]
    %v265 = vld [vmem:[#allocation8 + $0x14] sm:$0xf]
    %v266 = vld [vmem:[#allocation8 + $0x18] sm:$0xf]
    %v267 = vld [vmem:[#allocation8 + $0x1c] sm:$0xf]
    %v268 = vld [vmem:[#allocation8 + $0x20] sm:$0xf]
    %v269 = vld [vmem:[#allocation8 + $0x24] sm:$0xf]
    %v270 = vld [vmem:[#allocation8 + $0x28] sm:$0xf]
    %v271 = vld [vmem:[#allocation8 + $0x2c] sm:$0xf]
    %v272 = vld [vmem:[#allocation8 + $0x30] sm:$0xf]
    %v273 = vld [vmem:[#allocation8 + $0x34] sm:$0xf]
    %v274 = vld [vmem:[#allocation8 + $0x38] sm:$0xf]
    %v275 = vld [vmem:[#allocation8 + $0x3c] sm:$0xf]
    %v276 = vld [vmem:[%s6] sm:$0x1]
    %v278 = vperm.slane %v276, 0
    %v296 = vunpack.c.l.b16 %v260
    %v297 = vunpack.c.l.b16 %v261
    %v298 = vunpack.c.l.b16 %v262
    %v299 = vunpack.c.l.b16 %v263
    %v300 = vunpack.c.l.b16 %v264
    %v301 = vunpack.c.l.b16 %v265
    %v302 = vunpack.c.l.b16 %v266
    %v303 = vunpack.c.l.b16 %v267
    %v304 = vunpack.c.l.b16 %v268
    %v305 = vunpack.c.l.b16 %v269
    %v306 = vunpack.c.l.b16 %v270
    %v307 = vunpack.c.l.b16 %v271
    %v308 = vunpack.c.l.b16 %v272
    %v309 = vunpack.c.l.b16 %v273
    %v310 = vunpack.c.l.b16 %v274
    %v311 = vunpack.c.l.b16 %v275
    %v312 = vpack.c.b16 %v297, %v296
    %v313 = vpack.c.b16 %v299, %v298
    %v314 = vpack.c.b16 %v301, %v300
    %v315 = vpack.c.b16 %v303, %v302
    %v316 = vpack.c.b16 %v305, %v304
    %v317 = vpack.c.b16 %v307, %v306
    %v318 = vpack.c.b16 %v309, %v308
    %v319 = vpack.c.b16 %v311, %v310
    %328 = vmatpush.bf16.msra.mxu0 %v319
    %329 = vmatpush.bf16.msra.mxu0 %v318
    %330 = vmatpush.bf16.msra.mxu0 %v317
    %331 = vmatpush.bf16.msra.mxu0 %v316
    %332 = vmatpush.bf16.msra.mxu0 %v315
    %333 = vmatpush.bf16.msra.mxu0 %v314
    %334 = vmatpush.bf16.msra.mxu0 %v313
    %335 = vmatpush.bf16.msra.mxu0 %v312
    %336 = vmatmul.bf16.gmra.mxu0 %v259
    %v337 = vpop.f32.mrf.mxu0
    %v338 = vadd.f32 %v278, %v337
    %v339 = vpop.f32.mrf.mxu0
    %340 = vdwg.mxu0
    %341 = vst [vmem:[#allocation10] sm:$0xff] %v338
    // Predicated region
    $region46: #{tpu_custom_call.1} parent=1 // pred_check
      _
    $region47: #{tpu_custom_call.1} parent=1 // pred_check_branch
      %343 = sbr.rel (0) target = $region49
    $region48: #{tpu_custom_call.1} parent=1 // pred_region
      %345 = vsyncadd [#allocation4], 0
      %s347 = sshll.u32 [#allocation10], 4
      %s348 = int_to_ptr.vmem [resolvable:$true] %s347
      %s349 = sshll.u32 %s7, 4
      %s350 = int_to_ptr.hbm [resolvable:$true] %s349
      %352 = dma.vmem_to_hbm [thread:$0]  %s348, 128, %s350, [#allocation4]
    $region49: #{tpu_custom_call.1} parent=1 // pred_fallthru
      _
    // Predicated region
    $region50: #{tpu_custom_call.1} parent=1 // pred_check
      _
    $region51: #{tpu_custom_call.1} parent=1 // pred_check_branch
      %354 = sbr.rel (0) target = $region53
    $region52: #{tpu_custom_call.1} parent=1 // pred_region
      %356 = dma.done [#allocation4], 128
    $region53: #{tpu_custom_call.1} parent=1 // pred_fallthru
      _
    %357 = vsyncpa [#allocation3], 1
    %358 = vsyncpa [#allocation6], 1
    %359 = vsyncpa [#allocation9], 1
    %360 = vsyncpa [#allocation4], 1

</llo_original>
